<compile_context>
chip_gen: v5e
topology: v5e:2x2
jax: 0.10.0
libtpu: 0.0.40
codegen_flags: <defaults>
</compile_context>

<pallas_src>
import jax
import jax.numpy as jnp
from jax.experimental import pallas as pl
from jax.experimental.pallas import tpu as pltpu


def _dice_partial_kernel(preds_ref, target_ref, inter_ref, tsum_ref):
    t_idx = pl.program_id(1)

    @pl.when(t_idx == 0)
    def _init():
        inter_ref[...] = jnp.zeros_like(inter_ref)
        tsum_ref[...] = jnp.zeros_like(tsum_ref)

    # Cast per-tile (DMA moves the original dtype; bf16 inputs also accepted).
    p = preds_ref[...].astype(jnp.float32)   # (1, C, T)
    t = target_ref[...].astype(jnp.float32)  # (1, C, T)

    # Channel softmax (dim=1, matching F.softmax on 4-D input) without
    # materializing the normalized tensor.
    m = jnp.max(p, axis=1, keepdims=True)           # (1, 1, T)
    e = jnp.exp(p - m)                               # (1, C, T)
    denom = jnp.sum(e, axis=1, keepdims=True)        # (1, 1, T)
    num = jnp.sum(e * t, axis=1, keepdims=True)      # (1, 1, T)

    inter_ref[...] += num / denom                    # one divide per pixel
    tsum_ref[...] += jnp.sum(t, axis=1, keepdims=True)


def _choose_tile_hw(c, hw):
    lane = 128
    hw_lanes = ((hw + lane - 1) // lane) * lane
    # ~1 MiB of f32 per input block -> 2 inputs x 2 pipeline buffers ~ 4 MiB,
    # comfortably under the scoped-VMEM defaults on v5e / v6e / v7x.
    budget_elems = 1 << 18
    max_lanes = max(lane, (budget_elems // max(c, 1)) // lane * lane)
    return int(min(hw_lanes, max_lanes, 4096))


def dice_loss(preds, target):
    """preds, target: (N, C, H, W). Returns (dice_score, dice_loss) f32 scalars."""
    n, c, h, w = preds.shape
    hw = h * w
    tile_hw = _choose_tile_hw(c, hw)
    hw_pad = ((hw + tile_hw - 1) // tile_hw) * tile_hw

    preds3 = preds.reshape(n, c, hw)
    target3 = target.reshape(n, c, hw)
    if hw_pad != hw:
        pad = ((0, 0), (0, 0), (0, hw_pad - hw))
        # zero-padded pixels have target==0 -> contribute nothing to either sum
        preds3 = jnp.pad(preds3, pad)
        target3 = jnp.pad(target3, pad)

    n_hw_tiles = hw_pad // tile_hw

    grid_spec = pltpu.PrefetchScalarGridSpec(
        num_scalar_prefetch=0,
        grid=(n, n_hw_tiles),
        in_specs=[
            pl.BlockSpec((1, c, tile_hw), lambda b, t: (b, 0, t)),
            pl.BlockSpec((1, c, tile_hw), lambda b, t: (b, 0, t)),
        ],
        out_specs=(
            pl.BlockSpec((1, 1, tile_hw), lambda b, t: (b, 0, 0)),
            pl.BlockSpec((1, 1, tile_hw), lambda b, t: (b, 0, 0)),
        ),
    )

    inter_part, tsum_part = pl.pallas_call(
        _dice_partial_kernel,
        out_shape=(
            jax.ShapeDtypeStruct((n, 1, tile_hw), jnp.float32),
            jax.ShapeDtypeStruct((n, 1, tile_hw), jnp.float32),
        ),
        grid_spec=grid_spec,
        compiler_params=pltpu.CompilerParams(
            dimension_semantics=("parallel", "arbitrary")),
    )(preds3, target3)

    smooth = 1.0
    intersection = jnp.sum(inter_part)
    target_sum = jnp.sum(tsum_part)
    preds_sum = jnp.float32(n * hw)   # softmax over C sums to 1 per pixel
    union = preds_sum + target_sum
    dice_score = (2.0 * intersection + smooth) / (union + smooth)
    return dice_score, 1.0 - dice_score


def _reference(preds, target):
    # Pure-JAX reference mirroring the PyTorch module exactly.
    sm = jax.nn.softmax(preds, axis=1)
    batch = preds.shape[0]
    smooth = 1.0
    p = sm.reshape(batch, -1)
    t = target.reshape(batch, -1)
    intersection = jnp.sum(p * t)
    union = jnp.sum(p) + jnp.sum(t)
    dice_score = (2.0 * intersection + smooth) / (union + smooth)
    return dice_score, 1.0 - dice_score


if __name__ == "__main__":
    key = jax.random.PRNGKey(0)
    k1, k2 = jax.random.split(key)
    # small shapes consistent with a segmentation logits/target pair
    preds = jax.random.normal(k1, (2, 4, 16, 16), dtype=jnp.float32)
    target = (jax.random.uniform(k2, (2, 4, 16, 16)) > 0.5).astype(jnp.float32)

    score, loss = jax.jit(dice_loss)(preds, target)
    jax.block_until_ready((score, loss))

    ref_score, ref_loss = _reference(preds, target)
    assert jnp.allclose(score, ref_score, rtol=1e-5, atol=1e-5), (score, ref_score)
    assert jnp.allclose(loss, ref_loss, rtol=1e-5, atol=1e-5), (loss, ref_loss)
    print("KERNEL_OK")
</pallas_src>

<mosaic_0001>
module attributes {stable_mosaic.version = 11 : i64} {
  func.func @_dice_partial_kernel(%arg0: i32, %arg1: i32, %arg2: memref<1x4x256xf32, #tpu.memory_space<vmem>>, %arg3: memref<1x4x256xf32, #tpu.memory_space<vmem>>, %arg4: memref<1x1x256xf32, #tpu.memory_space<vmem>>, %arg5: memref<1x1x256xf32, #tpu.memory_space<vmem>>) attributes {dimension_semantics = [#tpu.dimension_semantics<parallel>, #tpu.dimension_semantics<arbitrary>], iteration_bounds = array<i64: 2, 1>, scalar_prefetch = 0 : i64, scratch_operands = 0 : i64, tpu.core_type = #tpu.core_type<tc>, window_params = [{transform_indices = @transform_0, window_bounds = array<i64: 1, 4, 256>}, {transform_indices = @transform_1, window_bounds = array<i64: 1, 4, 256>}, {transform_indices = @transform_2, window_bounds = array<i64: 1, 1, 256>}, {transform_indices = @transform_3, window_bounds = array<i64: 1, 1, 256>}]} {
    %c0_i32 = arith.constant 0 : i32
    %0 = arith.cmpi eq, %arg1, %c0_i32 : i32
    %1 = arith.extui %0 : i1 to i32
    %c0_i32_0 = arith.constant 0 : i32
    %2 = arith.cmpi ne, %1, %c0_i32_0 : i32
    scf.if %2 {
      %cst_21 = arith.constant 0.000000e+00 : f32
      %24 = vector.broadcast %cst_21 : f32 to vector<1x1x256xf32>
      %c0_22 = arith.constant 0 : index
      %c0_23 = arith.constant 0 : index
      %c0_24 = arith.constant 0 : index
      %25 = vector.load %arg4[%c0_22, %c0_23, %c0_24] : memref<1x1x256xf32, #tpu.memory_space<vmem>>, vector<1x1x256xf32>
      tpu.vector_store %arg4[%c0_22, %c0_23, %c0_24], %24 {strides = array<i32>} : memref<1x1x256xf32, #tpu.memory_space<vmem>>, vector<1x1x256xf32>,
      %cst_25 = arith.constant 0.000000e+00 : f32
      %26 = vector.broadcast %cst_25 : f32 to vector<1x1x256xf32>
      %c0_26 = arith.constant 0 : index
      %c0_27 = arith.constant 0 : index
      %c0_28 = arith.constant 0 : index
      %27 = vector.load %arg5[%c0_26, %c0_27, %c0_28] : memref<1x1x256xf32, #tpu.memory_space<vmem>>, vector<1x1x256xf32>
      tpu.vector_store %arg5[%c0_26, %c0_27, %c0_28], %26 {strides = array<i32>} : memref<1x1x256xf32, #tpu.memory_space<vmem>>, vector<1x1x256xf32>,
    } else {
    }
    %c0 = arith.constant 0 : index
    %c0_1 = arith.constant 0 : index
    %c0_2 = arith.constant 0 : index
    %3 = vector.load %arg2[%c0, %c0_1, %c0_2] : memref<1x4x256xf32, #tpu.memory_space<vmem>>, vector<1x4x256xf32>
    %c0_3 = arith.constant 0 : index
    %c0_4 = arith.constant 0 : index
    %c0_5 = arith.constant 0 : index
    %4 = vector.load %arg3[%c0_3, %c0_4, %c0_5] : memref<1x4x256xf32, #tpu.memory_space<vmem>>, vector<1x4x256xf32>
    %cst = arith.constant dense<0xFF800000> : vector<1x256xf32>
    %5 = vector.multi_reduction <maximumf>, %3, %cst [1] : vector<1x4x256xf32> to vector<1x256xf32>
    %6 = vector.shape_cast %5 : vector<1x256xf32> to vector<1x1x256xf32>
    %7 = vector.broadcast %6 : vector<1x1x256xf32> to vector<1x4x256xf32>
    %8 = arith.subf %3, %7 : vector<1x4x256xf32>
    %9 = math.exp %8 : vector<1x4x256xf32>
    %cst_6 = arith.constant dense<0.000000e+00> : vector<1x256xf32>
    %10 = vector.multi_reduction <add>, %9, %cst_6 [1] : vector<1x4x256xf32> to vector<1x256xf32>
    %11 = vector.shape_cast %10 : vector<1x256xf32> to vector<1x1x256xf32>
    %12 = arith.mulf %9, %4 : vector<1x4x256xf32>
    %cst_7 = arith.constant dense<0.000000e+00> : vector<1x256xf32>
    %13 = vector.multi_reduction <add>, %12, %cst_7 [1] : vector<1x4x256xf32> to vector<1x256xf32>
    %14 = vector.shape_cast %13 : vector<1x256xf32> to vector<1x1x256xf32>
    %c0_8 = arith.constant 0 : index
    %c0_9 = arith.constant 0 : index
    %c0_10 = arith.constant 0 : index
    %15 = vector.load %arg4[%c0_8, %c0_9, %c0_10] : memref<1x1x256xf32, #tpu.memory_space<vmem>>, vector<1x1x256xf32>
    %16 = arith.divf %14, %11 : vector<1x1x256xf32>
    %17 = arith.addf %15, %16 : vector<1x1x256xf32>
    %c0_11 = arith.constant 0 : index
    %c0_12 = arith.constant 0 : index
    %c0_13 = arith.constant 0 : index
    %18 = vector.load %arg4[%c0_11, %c0_12, %c0_13] : memref<1x1x256xf32, #tpu.memory_space<vmem>>, vector<1x1x256xf32>
    tpu.vector_store %arg4[%c0_11, %c0_12, %c0_13], %17 {strides = array<i32>} : memref<1x1x256xf32, #tpu.memory_space<vmem>>, vector<1x1x256xf32>,
    %c0_14 = arith.constant 0 : index
    %c0_15 = arith.constant 0 : index
    %c0_16 = arith.constant 0 : index
    %19 = vector.load %arg5[%c0_14, %c0_15, %c0_16] : memref<1x1x256xf32, #tpu.memory_space<vmem>>, vector<1x1x256xf32>
    %cst_17 = arith.constant dense<0.000000e+00> : vector<1x256xf32>
    %20 = vector.multi_reduction <add>, %4, %cst_17 [1] : vector<1x4x256xf32> to vector<1x256xf32>
    %21 = vector.shape_cast %20 : vector<1x256xf32> to vector<1x1x256xf32>
    %22 = arith.addf %19, %21 : vector<1x1x256xf32>
    %c0_18 = arith.constant 0 : index
    %c0_19 = arith.constant 0 : index
    %c0_20 = arith.constant 0 : index
    %23 = vector.load %arg5[%c0_18, %c0_19, %c0_20] : memref<1x1x256xf32, #tpu.memory_space<vmem>>, vector<1x1x256xf32>
    tpu.vector_store %arg5[%c0_18, %c0_19, %c0_20], %22 {strides = array<i32>} : memref<1x1x256xf32, #tpu.memory_space<vmem>>, vector<1x1x256xf32>,
    return
  }
  func.func @transform_0(%arg0: i32, %arg1: i32) -> (i32, i32, i32) {
    %c0_i32 = arith.constant 0 : i32
    %c0_i32_0 = arith.constant 0 : i32
    return %arg0, %c0_i32, %arg1 : i32, i32, i32
  }
  func.func @transform_1(%arg0: i32, %arg1: i32) -> (i32, i32, i32) {
    %c0_i32 = arith.constant 0 : i32
    %c0_i32_0 = arith.constant 0 : i32
    return %arg0, %c0_i32, %arg1 : i32, i32, i32
  }
  func.func @transform_2(%arg0: i32, %arg1: i32) -> (i32, i32, i32) {
    %c0_i32 = arith.constant 0 : i32
    %c0_i32_0 = arith.constant 0 : i32
    %c0_i32_1 = arith.constant 0 : i32
    return %arg0, %c0_i32, %c0_i32_0 : i32, i32, i32
  }
  func.func @transform_3(%arg0: i32, %arg1: i32) -> (i32, i32, i32) {
    %c0_i32 = arith.constant 0 : i32
    %c0_i32_0 = arith.constant 0 : i32
    %c0_i32_1 = arith.constant 0 : i32
    return %arg0, %c0_i32, %c0_i32_0 : i32, i32, i32
  }
}

</mosaic_0001>

<llo_original>
// kernel: dice_loss.1
$region0: #{dice_loss.1}
  #allocation0 [shape = 'u32[]', space=smem, size = 0x4, offset = 0x4, fixed_abs, tag = 'smem constant byte address 0x4 - core index']
  #allocation1 [shape = 'u32[72,128]{1,0:T(1,128)}', space=vmem, size = 0x9000, scoped, tag = 'internal scratch']
  %s0 = inlined_call_operand.vmem [shape: f32[2,4,256], index: 0, kind: input, shape index: {}]
  %s1 = inlined_call_operand.vmem [shape: f32[2,4,256], index: 1, kind: input, shape index: {}]
  %s2 = inlined_call_operand.vmem [shape: f32[2,1,256], index: 2, kind: output, shape index: {0}]
  %s3 = inlined_call_operand.vmem [shape: f32[2,1,256], index: 3, kind: output, shape index: {1}]
  %4 = xla_tuple %s2, %s3
  %s5 = sld [smem:[#allocation0]]
  $region53: #{dice_loss.1} parent=0
    _
  %s7 = ssub.s32 1, %s5
  %s8 = scalar_select 0, %s7, %s5
  loop: start=0, step=1, limit=4
  $region2: #{dice_loss.1} parent=0 // loop_pre_header
    _
  $region3: #{dice_loss.1} parent=0 // loop_header
    %s10 = sphi 0, %s14
    %p11 = scmp.ge.s32.totalorder %s10, 4
    %s17 = sphi 0, %s29
    %s18 = sphi 0, %s25
    %s19 = sphi 0, %s17
    %s20 = sphi 0, %s18
    %s21 = sphi 0, %s19
    %s22 = sphi 0, %s20
    %s34 = sphi 0, %s36
    %s37 = sphi 0, %s34
    %s38 = sphi 0, %s37
    %s54 = sphi 0, %s38
    %s62 = sphi 0, %s64
    %s65 = sphi 0, %s62
    %s66 = sphi 0, %s65
    %s82 = sphi 0, %s66
    %s88 = sphi 0, %s90
    %s91 = sphi 0, %s88
    %s92 = sphi 0, %s91
    %s108 = sphi 0, %s92
    %s114 = sphi 0, %s116
    %s117 = sphi 0, %s114
    %s118 = sphi 0, %s117
    %s134 = sphi 0, %s118
  $region4: #{dice_loss.1} parent=0 // loop_header_branch
    %13 = sbr.rel (%p11) target = $region8
  $region5: #{dice_loss.1} parent=0 // loop_body
    %s15 = ssub.s32 %s10, 1
    %s16 = ssub.s32 %s10, 2
    %s23 = sadd.s32 1, %s18
    %p24 = scmp.ge.s32.totalorder %s23, 1
    %s25 = scalar_select %p24, 0, %s23
    %s26 = sadd.s32 1, %s17
    %s27 = scalar_select %p24, %s26, %s17
    %p28 = scmp.ge.s32.totalorder %s27, 2
    %s29 = scalar_select %p28, 0, %s27
    %s30 = ssub.s32 %s17, %s29
    %s31 = ssub.s32 %s18, %s25
    %s32 = sor.u32 %s30, %s31
    %p33 = scmp.eq.s32.totalorder %s32, 0
    %s35 = sadd.s32 %s34, 1
    %s36 = scalar_select %p33, %s34, %s35
    %p39 = pneg %p33
    %p40 = scmp.eq.s32.totalorder %s10, 1
    %p41 = por %p39, %p40
    %p42 = scmp.ne.s32.totalorder %s34, %s37
    %p43 = scmp.eq.s32.totalorder %s10, 0
    %p44 = por %p42, %p43
    %p45 = scmp.ne.s32.totalorder %s34, %s37
    %p46 = scmp.eq.s32.totalorder %s15, 1
    %p47 = por %p45, %p46
    %p48 = scmp.ne.s32.totalorder %s37, %s38
    %p49 = scmp.eq.s32.totalorder %s15, 0
    %p50 = por %p48, %p49
    %p51 = scmp.ne.s32.totalorder %s37, %s38
    %p52 = scmp.eq.s32.totalorder %s16, 1
    %p53 = por %p51, %p52
    %p55 = scmp.ne.s32.totalorder %s38, %s54
    %p56 = scmp.eq.s32.totalorder %s16, 0
    %p57 = por %p55, %p56
    %s58 = ssub.s32 %s17, %s29
    %s59 = ssub.s32 %s18, %s25
    %s60 = sor.u32 %s58, %s59
    %p61 = scmp.eq.s32.totalorder %s60, 0
    %s63 = sadd.s32 %s62, 1
    %s64 = scalar_select %p61, %s62, %s63
    %p67 = pneg %p61
    %p68 = scmp.eq.s32.totalorder %s10, 1
    %p69 = por %p67, %p68
    %p70 = scmp.ne.s32.totalorder %s62, %s65
    %p71 = scmp.eq.s32.totalorder %s10, 0
    %p72 = por %p70, %p71
    %p73 = scmp.ne.s32.totalorder %s62, %s65
    %p74 = scmp.eq.s32.totalorder %s15, 1
    %p75 = por %p73, %p74
    %p76 = scmp.ne.s32.totalorder %s65, %s66
    %p77 = scmp.eq.s32.totalorder %s15, 0
    %p78 = por %p76, %p77
    %p79 = scmp.ne.s32.totalorder %s65, %s66
    %p80 = scmp.eq.s32.totalorder %s16, 1
    %p81 = por %p79, %p80
    %p83 = scmp.ne.s32.totalorder %s66, %s82
    %p84 = scmp.eq.s32.totalorder %s16, 0
    %p85 = por %p83, %p84
    %s86 = ssub.s32 %s17, %s29
    %p87 = scmp.eq.s32.totalorder %s86, 0
    %s89 = sadd.s32 %s88, 1
    %s90 = scalar_select %p87, %s88, %s89
    %p93 = pneg %p87
    %p94 = scmp.eq.s32.totalorder %s10, 1
    %p95 = por %p93, %p94
    %p96 = scmp.ne.s32.totalorder %s88, %s91
    %p97 = scmp.eq.s32.totalorder %s10, 0
    %p98 = por %p96, %p97
    %p99 = scmp.ne.s32.totalorder %s88, %s91
    %p100 = scmp.eq.s32.totalorder %s15, 1
    %p101 = por %p99, %p100
    %p102 = scmp.ne.s32.totalorder %s91, %s92
    %p103 = scmp.eq.s32.totalorder %s15, 0
    %p104 = por %p102, %p103
    %p105 = scmp.ne.s32.totalorder %s91, %s92
    %p106 = scmp.eq.s32.totalorder %s16, 1
    %p107 = por %p105, %p106
    %p109 = scmp.ne.s32.totalorder %s92, %s108
    %p110 = scmp.eq.s32.totalorder %s16, 0
    %p111 = por %p109, %p110
    %s112 = ssub.s32 %s17, %s29
    %p113 = scmp.eq.s32.totalorder %s112, 0
    %s115 = sadd.s32 %s114, 1
    %s116 = scalar_select %p113, %s114, %s115
    %p119 = pneg %p113
    %p120 = scmp.eq.s32.totalorder %s10, 1
    %p121 = por %p119, %p120
    %p122 = scmp.ne.s32.totalorder %s114, %s117
    %p123 = scmp.eq.s32.totalorder %s10, 0
    %p124 = por %p122, %p123
    %p125 = scmp.ne.s32.totalorder %s114, %s117
    %p126 = scmp.eq.s32.totalorder %s15, 1
    %p127 = por %p125, %p126
    %p128 = scmp.ne.s32.totalorder %s117, %s118
    %p129 = scmp.eq.s32.totalorder %s15, 0
    %p130 = por %p128, %p129
    %p131 = scmp.ne.s32.totalorder %s117, %s118
    %p132 = scmp.eq.s32.totalorder %s16, 1
    %p133 = por %p131, %p132
    %p135 = scmp.ne.s32.totalorder %s118, %s134
    %p136 = scmp.eq.s32.totalorder %s16, 0
    %p137 = por %p135, %p136
    %p138 = scmp.le.s32.totalorder 1, %s10
    %p139 = scmp.lt.s32.totalorder %s10, 3
    %p140 = pnand %p138, %p139
    %p141 = pneg %p140
    // Predicated region
    $region9: #{dice_loss.1} parent=5 // pred_check
      _
    $region10: #{dice_loss.1} parent=5 // pred_check_branch
      %143 = sbr.rel (%p140) target = $region12
    $region11: #{dice_loss.1} parent=5 // pred_region
      %s144 = ssub.s32 %s10, 1
    $region12: #{dice_loss.1} parent=5 // pred_fallthru
      _
    %p145 = scmp.lt.s32.totalorder %s10, 2
    // Predicated region
    $region13: #{dice_loss.1} parent=5 // pred_check
      %p146 = pneg %p145
    $region14: #{dice_loss.1} parent=5 // pred_check_branch
      %148 = sbr.rel (%p146) target = $region16
    $region15: #{dice_loss.1} parent=5 // pred_region
      // Predicated region
      $region17: #{dice_loss.1} parent=15 // pred_check
        %p149 = pneg %p44
      $region18: #{dice_loss.1} parent=15 // pred_check_branch
        %151 = sbr.rel (%p149) target = $region20
      $region19: #{dice_loss.1} parent=15 // pred_region
        %s152 = smul.u32 2, %s18
        %p153 = scmp.lt.s32.totalorder %s17, 1
        %s154 = scalar_select %p153, %s17, 1
        %p155 = scmp.lt.s32.totalorder %s152, 1
        %s156 = scalar_select %p155, %s152, 1
        %s157 = smul.addr %s154, 2
        %s158 = sadd.s32 %s156, %s157
        %s159 = smul.addr %s158, 4
        %s160 = scalar_lea.vmem %s0, %s159
        %s161 = smul.u32 2, %s18
      $region20: #{dice_loss.1} parent=15 // pred_fallthru
        _
      // Predicated region
      $region21: #{dice_loss.1} parent=15 // pred_check
        %p162 = pneg %p72
      $region22: #{dice_loss.1} parent=15 // pred_check_branch
        %164 = sbr.rel (%p162) target = $region24
      $region23: #{dice_loss.1} parent=15 // pred_region
        %s165 = smul.u32 2, %s18
        %p166 = scmp.lt.s32.totalorder %s17, 1
        %s167 = scalar_select %p166, %s17, 1
        %p168 = scmp.lt.s32.totalorder %s165, 1
        %s169 = scalar_select %p168, %s165, 1
        %s170 = smul.addr %s167, 2
        %s171 = sadd.s32 %s169, %s170
        %s172 = smul.addr %s171, 4
        %s173 = scalar_lea.vmem %s1, %s172
        %s174 = smul.u32 2, %s18
      $region24: #{dice_loss.1} parent=15 // pred_fallthru
        _
    $region16: #{dice_loss.1} parent=5 // pred_fallthru
      _
    %p175 = scmp.le.s32.totalorder 1, %s10
    %p176 = scmp.lt.s32.totalorder %s10, 3
    %p177 = pnand %p175, %p176
    %p178 = pneg %p177
    // Predicated region
    $region25: #{dice_loss.1} parent=5 // pred_check
      _
    $region26: #{dice_loss.1} parent=5 // pred_check_branch
      %180 = sbr.rel (%p177) target = $region28
    $region27: #{dice_loss.1} parent=5 // pred_region
      %s181 = ssub.s32 %s10, 1
      %s182 = smul.u32 2, %s20
      %p183 = scmp.lt.s32.totalorder %s19, 1
      %s184 = scalar_select %p183, %s19, 1
      %p185 = scmp.lt.s32.totalorder %s182, 1
      %s186 = scalar_select %p185, %s182, 1
      %s187 = smul.addr %s184, 2
      %s188 = sadd.s32 %s186, %s187
      %s189 = smul.addr %s188, 4
      %s190 = scalar_lea.vmem %s0, %s189
      %p191 = pneg %p50
      %p192 = pneg %p47
      %s193 = smul.u32 2, %s20
      %p194 = scmp.lt.s32.totalorder %s19, 1
      %s195 = scalar_select %p194, %s19, 1
      %p196 = scmp.lt.s32.totalorder %s193, 1
      %s197 = scalar_select %p196, %s193, 1
      %s198 = smul.addr %s195, 2
      %s199 = sadd.s32 %s197, %s198
      %s200 = smul.addr %s199, 4
      %s201 = scalar_lea.vmem %s1, %s200
      %p202 = pneg %p78
      %p203 = pneg %p75
      %p204 = pneg %p104
      %p205 = pneg %p101
      %p206 = scmp.lt.s32.totalorder %s19, 1
      %s207 = scalar_select %p206, %s19, 1
      %s208 = smul.addr %s207, 2
      %s209 = scalar_lea.vmem %s2, %s208
      %p210 = pneg %p130
      %p211 = pneg %p127
      %p212 = scmp.lt.s32.totalorder %s19, 1
      %s213 = scalar_select %p212, %s19, 1
      %s214 = smul.addr %s213, 2
      %s215 = scalar_lea.vmem %s3, %s214
      %s216 = smul.u32 2, %s20
      %p217 = scmp.lt.s32.totalorder %s19, 1
      %s218 = scalar_select %p217, %s19, 1
      %p219 = scmp.lt.s32.totalorder %s216, 1
      %s220 = scalar_select %p219, %s216, 1
      %s221 = smul.addr %s218, 2
      %s222 = sadd.s32 %s220, %s221
      %s223 = smul.addr %s222, 4
      %s224 = scalar_lea.vmem %s0, %s223
      %s225 = smul.u32 2, %s20
      %s226 = smul.u32 2, %s20
      %p227 = scmp.lt.s32.totalorder %s19, 1
      %s228 = scalar_select %p227, %s19, 1
      %p229 = scmp.lt.s32.totalorder %s226, 1
      %s230 = scalar_select %p229, %s226, 1
      %s231 = smul.addr %s228, 2
      %s232 = sadd.s32 %s230, %s231
      %s233 = smul.addr %s232, 4
      %s234 = scalar_lea.vmem %s1, %s233
      %s235 = smul.u32 2, %s20
      %p236 = scmp.lt.s32.totalorder %s19, 1
      %s237 = scalar_select %p236, %s19, 1
      %s238 = smul.addr %s237, 2
      %s239 = scalar_lea.vmem %s2, %s238
      %p240 = scmp.lt.s32.totalorder %s19, 1
      %s241 = scalar_select %p240, %s19, 1
      %s242 = smul.addr %s241, 2
      %s243 = scalar_lea.vmem %s3, %s242
      %p244 = scmp.eq.s32.totalorder %s20, 0
      // Predicated region
      $region29: #{dice_loss.1} parent=27 // pred_check
        %p245 = pneg %p244
      $region30: #{dice_loss.1} parent=27 // pred_check_branch
        %247 = sbr.rel (%p245) target = $region32
      $region31: #{dice_loss.1} parent=27 // pred_region
        %v248 = vlaneseq
        %vm249 = vcmp.ge.s32.totalorder %v248, 0
        %vm250 = vcmp.lt.s32.totalorder %v248, 256
        %vm251 = vmand %vm249, %vm250
        %252 = vst.msk [vmem:[%s239] sm:$0x3] %vm251, 0.0
        %253 = vst.msk [vmem:[%s243] sm:$0x3] %vm251, 0.0
      $region32: #{dice_loss.1} parent=27 // pred_fallthru
        _
      %v254 = vld [vmem:[%s224] sm:$0xff]
      %v255 = vld [vmem:[%s234] sm:$0xff]
      %257 = vst [vmem:[#allocation1] ss:$2 sm:$0xff] %v254
      %v258 = vld.sshfl [vmem:[#allocation1] sm:$0xff pattern:$0x75316420]
      %v259 = vld.sshfl [vmem:[#allocation1 + $0x8] sm:$0xff pattern:$0x75316420]
      %vm262 = vcmask 1043456
      %v263 = vsel %vm262, %v258, -inf
      %v264 = vrot.slane %v263, 4
      %v265 = vmax.f32 %v263, %v264
      %v266 = vrot.slane %v265, 2
      %v267 = vmax.f32 %v265, %v266
      %v268 = vrot.slane %v267, 1
      %v269 = vmax.f32 %v267, %v268
      %v270 = vsel %vm262, %v259, -inf
      %v271 = vrot.slane %v270, 4
      %v272 = vmax.f32 %v270, %v271
      %v273 = vrot.slane %v272, 2
      %v274 = vmax.f32 %v272, %v273
      %v275 = vrot.slane %v274, 1
      %v276 = vmax.f32 %v274, %v275
      %v279 = vrot.slane %v276, 4
      %v280 = vsel %vm262, %v269, %v279
      %v282 = vsub.f32 %v254, %v280
      %v283 = vmul.f32 %v282, 1.442695
      %v284 = vpow.pop %v283
      %286 = vst [vmem:[#allocation1] ss:$2 sm:$0xff] %v284
      %v287 = vld.sshfl [vmem:[#allocation1] sm:$0xff pattern:$0x75316420]
      %v288 = vld.sshfl [vmem:[#allocation1 + $0x8] sm:$0xff pattern:$0x75316420]
      %v291 = vsel %vm262, %v287, 0.0
      %v292 = vrot.slane %v291, 4
      %v293 = vadd.f32 %v291, %v292
      %v294 = vrot.slane %v293, 2
      %v295 = vadd.f32 %v293, %v294
      %v296 = vrot.slane %v295, 1
      %v297 = vadd.f32 %v295, %v296
      %v298 = vsel %vm262, %v288, 0.0
      %v299 = vrot.slane %v298, 4
      %v300 = vadd.f32 %v298, %v299
      %v301 = vrot.slane %v300, 2
      %v302 = vadd.f32 %v300, %v301
      %v303 = vrot.slane %v302, 1
      %v304 = vadd.f32 %v302, %v303
      %v305 = vmul.f32 %v284, %v255
      %307 = vst [vmem:[#allocation1] ss:$2 sm:$0xff] %v305
      %v308 = vld.sshfl [vmem:[#allocation1] sm:$0xff pattern:$0x75316420]
      %v309 = vld.sshfl [vmem:[#allocation1 + $0x8] sm:$0xff pattern:$0x75316420]
      %v312 = vsel %vm262, %v308, 0.0
      %v313 = vrot.slane %v312, 4
      %v314 = vadd.f32 %v312, %v313
      %v315 = vrot.slane %v314, 2
      %v316 = vadd.f32 %v314, %v315
      %v317 = vrot.slane %v316, 1
      %v318 = vadd.f32 %v316, %v317
      %v319 = vsel %vm262, %v309, 0.0
      %v320 = vrot.slane %v319, 4
      %v321 = vadd.f32 %v319, %v320
      %v322 = vrot.slane %v321, 2
      %v323 = vadd.f32 %v321, %v322
      %v324 = vrot.slane %v323, 1
      %v325 = vadd.f32 %v323, %v324
      %v326 = vld [vmem:[%s239] sm:$0x3]
      %v327 = vrcp.pop %v297
      %v328 = vmul.f32 %v297, %v327
      %v329 = vsub.f32 1.0, %v328
      %v330 = vmul.f32 %v327, %v329
      %v331 = vadd.f32 %v327, %v330
      %vm332 = vweird.f32 %v297
      %vm333 = vweird.f32 %v327
      %vm334 = vmor %vm332, %vm333
      %v335 = vsel %vm334, %v327, %v331
      %v336 = vand.u32 2147483647, %v297
      %vm337 = vcmp.eq.f32.partialorder %v336, 8.507059e+37
      %v338 = vand.u32 %v297, 2147483648
      %v339 = vor.u32 1.1754944e-38, %v338
      %v340 = vsel %vm337, %v339, %v335
      %v341 = vmul.f32 %v318, %v340
      %v342 = vrcp.pop %v304
      %v343 = vmul.f32 %v304, %v342
      %v344 = vsub.f32 1.0, %v343
      %v345 = vmul.f32 %v342, %v344
      %v346 = vadd.f32 %v342, %v345
      %vm347 = vweird.f32 %v304
      %vm348 = vweird.f32 %v342
      %vm349 = vmor %vm347, %vm348
      %v350 = vsel %vm349, %v342, %v346
      %v351 = vand.u32 2147483647, %v304
      %vm352 = vcmp.eq.f32.partialorder %v351, 8.507059e+37
      %v353 = vand.u32 %v304, 2147483648
      %v354 = vor.u32 1.1754944e-38, %v353
      %v355 = vsel %vm352, %v354, %v350
      %v356 = vmul.f32 %v325, %v355
      %v359 = vrot.slane %v356, 7
      %vm360 = vcmask 1040384
      %v361 = vsel %vm360, %v341, %v359
      %v363 = vadd.f32 %v326, %v361
      %v364 = vlaneseq
      %vm365 = vcmp.ge.s32.totalorder %v364, 0
      %vm366 = vcmp.lt.s32.totalorder %v364, 256
      %vm367 = vmand %vm365, %vm366
      %368 = vst.msk [vmem:[%s239] sm:$0x3] %vm367, %v363
      %v369 = vld [vmem:[%s243] sm:$0x3]
      %371 = vst [vmem:[#allocation1] ss:$2 sm:$0xff] %v255
      %v372 = vld.sshfl [vmem:[#allocation1] sm:$0xff pattern:$0x75316420]
      %v373 = vld.sshfl [vmem:[#allocation1 + $0x8] sm:$0xff pattern:$0x75316420]
      %v376 = vsel %vm262, %v372, 0.0
      %v377 = vrot.slane %v376, 4
      %v378 = vadd.f32 %v376, %v377
      %v379 = vrot.slane %v378, 2
      %v380 = vadd.f32 %v378, %v379
      %v381 = vrot.slane %v380, 1
      %v382 = vadd.f32 %v380, %v381
      %v383 = vsel %vm262, %v373, 0.0
      %v384 = vrot.slane %v383, 4
      %v385 = vadd.f32 %v383, %v384
      %v386 = vrot.slane %v385, 2
      %v387 = vadd.f32 %v385, %v386
      %v388 = vrot.slane %v387, 1
      %v389 = vadd.f32 %v387, %v388
      %v392 = vrot.slane %v389, 7
      %v393 = vsel %vm360, %v382, %v392
      %v395 = vadd.f32 %v369, %v393
      %396 = vst.msk [vmem:[%s243] sm:$0x3] %vm367, %v395
      %p397 = scmp.lt.s32.totalorder %s19, 1
      %s398 = scalar_select %p397, %s19, 1
      %s399 = smul.addr %s398, 2
      %s400 = scalar_lea.vmem %s2, %s399
      %p401 = scmp.lt.s32.totalorder %s19, 1
      %s402 = scalar_select %p401, %s19, 1
      %s403 = smul.addr %s402, 2
      %s404 = scalar_lea.vmem %s3, %s403
      // Predicated region
      $region33: #{dice_loss.1} parent=27 // pred_check
        %p405 = pneg %p101
      $region34: #{dice_loss.1} parent=27 // pred_check_branch
        %407 = sbr.rel (%p405) target = $region36
      $region35: #{dice_loss.1} parent=27 // pred_region
        _
      $region36: #{dice_loss.1} parent=27 // pred_fallthru
        _
      // Predicated region
      $region37: #{dice_loss.1} parent=27 // pred_check
        %p408 = pneg %p127
      $region38: #{dice_loss.1} parent=27 // pred_check_branch
        %410 = sbr.rel (%p408) target = $region40
      $region39: #{dice_loss.1} parent=27 // pred_region
        _
      $region40: #{dice_loss.1} parent=27 // pred_fallthru
        _
    $region28: #{dice_loss.1} parent=5 // pred_fallthru
      _
    %p411 = scmp.le.s32.totalorder 2, %s10
    // Predicated region
    $region41: #{dice_loss.1} parent=5 // pred_check
      %p412 = pneg %p411
    $region42: #{dice_loss.1} parent=5 // pred_check_branch
      %414 = sbr.rel (%p412) target = $region44
    $region43: #{dice_loss.1} parent=5 // pred_region
      %s415 = ssub.s32 %s10, 2
      // Predicated region
      $region45: #{dice_loss.1} parent=43 // pred_check
        %p416 = pneg %p107
      $region46: #{dice_loss.1} parent=43 // pred_check_branch
        %418 = sbr.rel (%p416) target = $region48
      $region47: #{dice_loss.1} parent=43 // pred_region
        %p419 = scmp.lt.s32.totalorder %s21, 1
        %s420 = scalar_select %p419, %s21, 1
        %s421 = smul.addr %s420, 2
        %s422 = scalar_lea.vmem %s2, %s421
      $region48: #{dice_loss.1} parent=43 // pred_fallthru
        _
      // Predicated region
      $region49: #{dice_loss.1} parent=43 // pred_check
        %p423 = pneg %p133
      $region50: #{dice_loss.1} parent=43 // pred_check_branch
        %425 = sbr.rel (%p423) target = $region52
      $region51: #{dice_loss.1} parent=43 // pred_region
        %p426 = scmp.lt.s32.totalorder %s21, 1
        %s427 = scalar_select %p426, %s21, 1
        %s428 = smul.addr %s427, 2
        %s429 = scalar_lea.vmem %s3, %s428
      $region52: #{dice_loss.1} parent=43 // pred_fallthru
        _
    $region44: #{dice_loss.1} parent=5 // pred_fallthru
      _
  $region6: #{dice_loss.1} parent=0 // loop_footer
    %s14 = sadd.s32 1, %s10
  $region7: #{dice_loss.1} parent=0 // loop_footer_branch
    %9 = sbr.rel target = $region3
  $region8: #{dice_loss.1} parent=0 // loop_exit
    _

</llo_original>
